<compile_context>
chip_gen: v5e
topology: v5e:2x2
jax: 0.10.0
libtpu: 0.0.40
codegen_flags: <defaults>
</compile_context>

<pallas_src>
import functools

import numpy as np
import jax
import jax.numpy as jnp
from jax.experimental import pallas as pl
from jax.experimental.pallas import tpu as pltpu


def _round_up(v, m):
    return (v + m - 1) // m * m


def _pick_batch_block(n, max_nb=8):
    """Largest divisor of n that is <= max_nb while keeping the grid length >= 2
    (v7x has two TensorCores; a length-1 grid leaves one idle)."""
    best = 1
    for nb in range(1, min(n, max_nb) + 1):
        if n % nb == 0 and (n // nb >= 2 or n == 1):
            best = nb
    return best


def _make_conv3x3_kernel(nb, wp, flat_out):
    """3x3 conv (no bias) over a block of `nb` samples.

    x_ref : (nb, Cin, FLAT_IN)   zero-padded input, padded spatial plane
                                 (H+2, W+2) flattened onto the lane axis.
    w_ref : (9, Cout, Cin)       conv taps, tap index = ky*3 + kx.
    o_ref : (nb, Cout, FLAT_OUT) conv output on the padded-width grid
                                 (columns w in [W, W+2) are junk; cropped by
                                 the wrapper).
    """
    def kernel(x_ref, w_ref, o_ref):
        cout = w_ref.shape[1]
        for i in range(nb):                       # static unroll over the batch block
            xi = x_ref[i]                         # (Cin, FLAT_IN)
            acc = jnp.zeros((cout, flat_out), jnp.float32)
            for ky in range(3):
                for kx in range(3):
                    off = ky * wp + kx            # static lane offset
                    win = xi[:, off:off + flat_out]          # (Cin, FLAT_OUT)
                    acc = acc + jnp.dot(w_ref[ky * 3 + kx], win,
                                        preferred_element_type=jnp.float32)
            o_ref[i] = acc
    return kernel


@functools.partial(jax.jit, static_argnames=("batch_block",))
def upsample_pallas(x, weight, batch_block=None):
    """x: (N, Cin, H, W) f32, weight: (Cout, Cin, 3, 3) f32 with Cout % 4 == 0."""
    n, cin, h, w = x.shape
    cout = weight.shape[0]
    assert weight.shape == (cout, cin, 3, 3)
    assert cout % 4 == 0, "PixelShuffle(2) needs conv channels divisible by 4"
    r = 2

    hp, wp = h + 2, w + 2
    flat_out = h * wp                        # conv output on the padded-width grid
    flat_in = _round_up(hp * wp + 2, 128)    # room for the largest tap offset (2*wp+2)

    nb = batch_block if batch_block is not None else _pick_batch_block(n)
    assert n % nb == 0
    grid = n // nb

    # ---- wrapper-side layout plumbing (XLA): pad + flatten the spatial plane ----
    xp = jnp.pad(x.astype(jnp.float32), ((0, 0), (0, 0), (1, 1), (1, 1)))
    xf = xp.reshape(n, cin, hp * wp)
    xf = jnp.pad(xf, ((0, 0), (0, 0), (0, flat_in - hp * wp)))       # (n, cin, flat_in)
    wt = weight.astype(jnp.float32).transpose(2, 3, 0, 1).reshape(9, cout, cin)

    # Explicit VMEM budget: double-buffered x/out blocks + the constant weight block.
    x_blk = nb * cin * flat_in * 4
    o_blk = nb * cout * flat_out * 4
    w_blk = 9 * cout * cin * 4
    vmem_limit = int(min(48 * 2**20, max(4 * 2**20, 4 * (x_blk + o_blk + w_blk))))

    kernel = _make_conv3x3_kernel(nb, wp, flat_out)
    y_flat = pl.pallas_call(
        kernel,
        out_shape=jax.ShapeDtypeStruct((n, cout, flat_out), jnp.float32),
        grid_spec=pltpu.PrefetchScalarGridSpec(
            num_scalar_prefetch=0,
            grid=(grid,),
            in_specs=[
                pl.BlockSpec((nb, cin, flat_in), lambda g: (g, 0, 0)),   # x block
                pl.BlockSpec((9, cout, cin), lambda g: (0, 0, 0)),       # weight (constant)
            ],
            out_specs=pl.BlockSpec((nb, cout, flat_out), lambda g: (g, 0, 0)),
        ),
        compiler_params=pltpu.CompilerParams(
            dimension_semantics=("parallel",),
            vmem_limit_bytes=vmem_limit),
    )(xf, wt)

    # Crop the two padding columns of every row and restore (N, Cout, H, W).
    y = y_flat.reshape(n, cout, h, wp)[:, :, :, :w]

    # PixelShuffle(2): pure layout permutation, done as an XLA reshape/transpose.
    # TODO(synk): an in-kernel pixel shuffle would need stride-2 lane/sublane
    # interleaving stores; kept wrapper-side as layout plumbing.
    c_out = cout // (r * r)
    y = y.reshape(n, c_out, r, r, h, w).transpose(0, 1, 4, 2, 5, 3)
    return y.reshape(n, c_out, h * r, w * r)


# ----------------------------------------------------------------------------
# Pure-JAX reference (exact PyTorch semantics) for the correctness check.
# ----------------------------------------------------------------------------
def upsample_ref(x, weight):
    y = jax.lax.conv_general_dilated(
        x, weight, window_strides=(1, 1), padding=((1, 1), (1, 1)),
        dimension_numbers=("NCHW", "OIHW", "NCHW"),
        precision=jax.lax.Precision.HIGHEST)
    n, cout, h, w = y.shape
    c = cout // 4
    y = y.reshape(n, c, 2, 2, h, w).transpose(0, 1, 4, 2, 5, 3)
    return y.reshape(n, c, 2 * h, 2 * w)


if __name__ == "__main__":
    N, n_feat, H, W = 2, 4, 16, 16
    Cout = 2 * n_feat                       # conv output channels (before PixelShuffle)
    key = jax.random.PRNGKey(0)
    kx_, kw_ = jax.random.split(key)
    x = jax.random.normal(kx_, (N, n_feat, H, W), jnp.float32)
    bound = 1.0 / np.sqrt(n_feat * 9)       # nn.Conv2d default init scale
    wgt = jax.random.uniform(kw_, (Cout, n_feat, 3, 3), jnp.float32, -bound, bound)

    out = jax.block_until_ready(upsample_pallas(x, wgt))
    ref = jax.block_until_ready(upsample_ref(x, wgt))

    assert out.shape == (N, n_feat // 2, 2 * H, 2 * W), out.shape
    err = float(jnp.max(jnp.abs(out - ref)))
    # Kernel uses default (non-HIGHEST) MXU precision per the perf review; the
    # reference is f32-HIGHEST, so allow bf16-pass-level error.
    assert err < 2e-2, f"max abs err {err}"
    print("KERNEL_OK")
</pallas_src>

<mosaic_0001>
module attributes {stable_mosaic.version = 11 : i64} {
  func.func @kernel(%arg0: i32, %arg1: memref<1x4x384xf32, #tpu.memory_space<vmem>>, %arg2: memref<9x8x4xf32, #tpu.memory_space<vmem>>, %arg3: memref<1x8x288xf32, #tpu.memory_space<vmem>>) attributes {dimension_semantics = [#tpu.dimension_semantics<parallel>], iteration_bounds = array<i64: 2>, scalar_prefetch = 0 : i64, scratch_operands = 0 : i64, tpu.core_type = #tpu.core_type<tc>, window_params = [{transform_indices = @transform_0, window_bounds = array<i64: 1, 4, 384>}, {pipeline_mode = #tpu.pipeline_mode<synchronous>, transform_indices = @transform_1, window_bounds = array<i64: 9, 8, 4>}, {transform_indices = @transform_2, window_bounds = array<i64: 1, 8, 288>}]} {
    %c0 = arith.constant 0 : index
    %c0_0 = arith.constant 0 : index
    %c0_1 = arith.constant 0 : index
    %0 = vector.load %arg1[%c0, %c0_0, %c0_1] : memref<1x4x384xf32, #tpu.memory_space<vmem>>, vector<1x4x384xf32>
    %1 = vector.shape_cast %0 : vector<1x4x384xf32> to vector<4x384xf32>
    %cst = arith.constant 0.000000e+00 : f32
    %2 = vector.broadcast %cst : f32 to vector<8x288xf32>
    %3 = vector.extract_strided_slice %1 {offsets = [0, 0], sizes = [4, 288], strides = [1, 1]} : vector<4x384xf32> to vector<4x288xf32>
    %c0_2 = arith.constant 0 : index
    %c0_3 = arith.constant 0 : index
    %c0_4 = arith.constant 0 : index
    %4 = vector.load %arg2[%c0_2, %c0_3, %c0_4] : memref<9x8x4xf32, #tpu.memory_space<vmem>>, vector<1x8x4xf32>
    %5 = vector.shape_cast %4 : vector<1x8x4xf32> to vector<8x4xf32>
    %cst_5 = arith.constant dense<0.000000e+00> : vector<8x288xf32>
    %6 = tpu.matmul %5, %3, %cst_5 {dimension_numbers = #tpu.dot_dimension_numbers<[1], [0], [0], [1], [0, 0, 1, 1], [], []>} : vector<8x4xf32>, vector<4x288xf32>, vector<8x288xf32> -> vector<8x288xf32>
    %7 = arith.addf %2, %6 : vector<8x288xf32>
    %8 = vector.extract_strided_slice %1 {offsets = [0, 1], sizes = [4, 288], strides = [1, 1]} : vector<4x384xf32> to vector<4x288xf32>
    %c1 = arith.constant 1 : index
    %c0_6 = arith.constant 0 : index
    %c0_7 = arith.constant 0 : index
    %9 = vector.load %arg2[%c1, %c0_6, %c0_7] : memref<9x8x4xf32, #tpu.memory_space<vmem>>, vector<1x8x4xf32>
    %10 = vector.shape_cast %9 : vector<1x8x4xf32> to vector<8x4xf32>
    %cst_8 = arith.constant dense<0.000000e+00> : vector<8x288xf32>
    %11 = tpu.matmul %10, %8, %cst_8 {dimension_numbers = #tpu.dot_dimension_numbers<[1], [0], [0], [1], [0, 0, 1, 1], [], []>} : vector<8x4xf32>, vector<4x288xf32>, vector<8x288xf32> -> vector<8x288xf32>
    %12 = arith.addf %7, %11 : vector<8x288xf32>
    %13 = vector.extract_strided_slice %1 {offsets = [0, 2], sizes = [4, 288], strides = [1, 1]} : vector<4x384xf32> to vector<4x288xf32>
    %c2 = arith.constant 2 : index
    %c0_9 = arith.constant 0 : index
    %c0_10 = arith.constant 0 : index
    %14 = vector.load %arg2[%c2, %c0_9, %c0_10] : memref<9x8x4xf32, #tpu.memory_space<vmem>>, vector<1x8x4xf32>
    %15 = vector.shape_cast %14 : vector<1x8x4xf32> to vector<8x4xf32>
    %cst_11 = arith.constant dense<0.000000e+00> : vector<8x288xf32>
    %16 = tpu.matmul %15, %13, %cst_11 {dimension_numbers = #tpu.dot_dimension_numbers<[1], [0], [0], [1], [0, 0, 1, 1], [], []>} : vector<8x4xf32>, vector<4x288xf32>, vector<8x288xf32> -> vector<8x288xf32>
    %17 = arith.addf %12, %16 : vector<8x288xf32>
    %18 = vector.extract_strided_slice %1 {offsets = [0, 18], sizes = [4, 288], strides = [1, 1]} : vector<4x384xf32> to vector<4x288xf32>
    %c3 = arith.constant 3 : index
    %c0_12 = arith.constant 0 : index
    %c0_13 = arith.constant 0 : index
    %19 = vector.load %arg2[%c3, %c0_12, %c0_13] : memref<9x8x4xf32, #tpu.memory_space<vmem>>, vector<1x8x4xf32>
    %20 = vector.shape_cast %19 : vector<1x8x4xf32> to vector<8x4xf32>
    %cst_14 = arith.constant dense<0.000000e+00> : vector<8x288xf32>
    %21 = tpu.matmul %20, %18, %cst_14 {dimension_numbers = #tpu.dot_dimension_numbers<[1], [0], [0], [1], [0, 0, 1, 1], [], []>} : vector<8x4xf32>, vector<4x288xf32>, vector<8x288xf32> -> vector<8x288xf32>
    %22 = arith.addf %17, %21 : vector<8x288xf32>
    %23 = vector.extract_strided_slice %1 {offsets = [0, 19], sizes = [4, 288], strides = [1, 1]} : vector<4x384xf32> to vector<4x288xf32>
    %c4 = arith.constant 4 : index
    %c0_15 = arith.constant 0 : index
    %c0_16 = arith.constant 0 : index
    %24 = vector.load %arg2[%c4, %c0_15, %c0_16] : memref<9x8x4xf32, #tpu.memory_space<vmem>>, vector<1x8x4xf32>
    %25 = vector.shape_cast %24 : vector<1x8x4xf32> to vector<8x4xf32>
    %cst_17 = arith.constant dense<0.000000e+00> : vector<8x288xf32>
    %26 = tpu.matmul %25, %23, %cst_17 {dimension_numbers = #tpu.dot_dimension_numbers<[1], [0], [0], [1], [0, 0, 1, 1], [], []>} : vector<8x4xf32>, vector<4x288xf32>, vector<8x288xf32> -> vector<8x288xf32>
    %27 = arith.addf %22, %26 : vector<8x288xf32>
    %28 = vector.extract_strided_slice %1 {offsets = [0, 20], sizes = [4, 288], strides = [1, 1]} : vector<4x384xf32> to vector<4x288xf32>
    %c5 = arith.constant 5 : index
    %c0_18 = arith.constant 0 : index
    %c0_19 = arith.constant 0 : index
    %29 = vector.load %arg2[%c5, %c0_18, %c0_19] : memref<9x8x4xf32, #tpu.memory_space<vmem>>, vector<1x8x4xf32>
    %30 = vector.shape_cast %29 : vector<1x8x4xf32> to vector<8x4xf32>
    %cst_20 = arith.constant dense<0.000000e+00> : vector<8x288xf32>
    %31 = tpu.matmul %30, %28, %cst_20 {dimension_numbers = #tpu.dot_dimension_numbers<[1], [0], [0], [1], [0, 0, 1, 1], [], []>} : vector<8x4xf32>, vector<4x288xf32>, vector<8x288xf32> -> vector<8x288xf32>
    %32 = arith.addf %27, %31 : vector<8x288xf32>
    %33 = vector.extract_strided_slice %1 {offsets = [0, 36], sizes = [4, 288], strides = [1, 1]} : vector<4x384xf32> to vector<4x288xf32>
    %c6 = arith.constant 6 : index
    %c0_21 = arith.constant 0 : index
    %c0_22 = arith.constant 0 : index
    %34 = vector.load %arg2[%c6, %c0_21, %c0_22] : memref<9x8x4xf32, #tpu.memory_space<vmem>>, vector<1x8x4xf32>
    %35 = vector.shape_cast %34 : vector<1x8x4xf32> to vector<8x4xf32>
    %cst_23 = arith.constant dense<0.000000e+00> : vector<8x288xf32>
    %36 = tpu.matmul %35, %33, %cst_23 {dimension_numbers = #tpu.dot_dimension_numbers<[1], [0], [0], [1], [0, 0, 1, 1], [], []>} : vector<8x4xf32>, vector<4x288xf32>, vector<8x288xf32> -> vector<8x288xf32>
    %37 = arith.addf %32, %36 : vector<8x288xf32>
    %38 = vector.extract_strided_slice %1 {offsets = [0, 37], sizes = [4, 288], strides = [1, 1]} : vector<4x384xf32> to vector<4x288xf32>
    %c7 = arith.constant 7 : index
    %c0_24 = arith.constant 0 : index
    %c0_25 = arith.constant 0 : index
    %39 = vector.load %arg2[%c7, %c0_24, %c0_25] : memref<9x8x4xf32, #tpu.memory_space<vmem>>, vector<1x8x4xf32>
    %40 = vector.shape_cast %39 : vector<1x8x4xf32> to vector<8x4xf32>
    %cst_26 = arith.constant dense<0.000000e+00> : vector<8x288xf32>
    %41 = tpu.matmul %40, %38, %cst_26 {dimension_numbers = #tpu.dot_dimension_numbers<[1], [0], [0], [1], [0, 0, 1, 1], [], []>} : vector<8x4xf32>, vector<4x288xf32>, vector<8x288xf32> -> vector<8x288xf32>
    %42 = arith.addf %37, %41 : vector<8x288xf32>
    %43 = vector.extract_strided_slice %1 {offsets = [0, 38], sizes = [4, 288], strides = [1, 1]} : vector<4x384xf32> to vector<4x288xf32>
    %c8 = arith.constant 8 : index
    %c0_27 = arith.constant 0 : index
    %c0_28 = arith.constant 0 : index
    %44 = vector.load %arg2[%c8, %c0_27, %c0_28] : memref<9x8x4xf32, #tpu.memory_space<vmem>>, vector<1x8x4xf32>
    %45 = vector.shape_cast %44 : vector<1x8x4xf32> to vector<8x4xf32>
    %cst_29 = arith.constant dense<0.000000e+00> : vector<8x288xf32>
    %46 = tpu.matmul %45, %43, %cst_29 {dimension_numbers = #tpu.dot_dimension_numbers<[1], [0], [0], [1], [0, 0, 1, 1], [], []>} : vector<8x4xf32>, vector<4x288xf32>, vector<8x288xf32> -> vector<8x288xf32>
    %47 = arith.addf %42, %46 : vector<8x288xf32>
    %c0_30 = arith.constant 0 : index
    %c0_31 = arith.constant 0 : index
    %c0_32 = arith.constant 0 : index
    %48 = vector.load %arg3[%c0_30, %c0_31, %c0_32] : memref<1x8x288xf32, #tpu.memory_space<vmem>>, vector<1x8x288xf32>
    %49 = vector.shape_cast %48 : vector<1x8x288xf32> to vector<8x288xf32>
    %50 = vector.shape_cast %47 : vector<8x288xf32> to vector<1x8x288xf32>
    tpu.vector_store %arg3[%c0_30, %c0_31, %c0_32], %50 {strides = array<i32>} : memref<1x8x288xf32, #tpu.memory_space<vmem>>, vector<1x8x288xf32>,
    return
  }
  func.func @transform_0(%arg0: i32) -> (i32, i32, i32) {
    %c0_i32 = arith.constant 0 : i32
    %c0_i32_0 = arith.constant 0 : i32
    %c0_i32_1 = arith.constant 0 : i32
    return %arg0, %c0_i32, %c0_i32_0 : i32, i32, i32
  }
  func.func @transform_1(%arg0: i32) -> (i32, i32, i32) {
    %c0_i32 = arith.constant 0 : i32
    %c0_i32_0 = arith.constant 0 : i32
    %c0_i32_1 = arith.constant 0 : i32
    %c0_i32_2 = arith.constant 0 : i32
    return %c0_i32, %c0_i32_0, %c0_i32_1 : i32, i32, i32
  }
  func.func @transform_2(%arg0: i32) -> (i32, i32, i32) {
    %c0_i32 = arith.constant 0 : i32
    %c0_i32_0 = arith.constant 0 : i32
    %c0_i32_1 = arith.constant 0 : i32
    return %arg0, %c0_i32, %c0_i32_0 : i32, i32, i32
  }
}

</mosaic_0001>

<llo_original>
// kernel: upsample_pallas.1
$region0: #{upsample_pallas.1}
  #allocation0 [shape = 'u32[]', space=smem, size = 0x4, offset = 0x4, fixed_abs, tag = 'smem constant byte address 0x4 - core index']
  #allocation1 [shape = 'u32[72,128]{1,0:T(1,128)}', space=vmem, size = 0x9000, scoped, tag = 'internal scratch']
  %s0 = inlined_call_operand.vmem [shape: f32[2,4,384], index: 0, kind: input, shape index: {}]
  %s1 = inlined_call_operand.vmem [shape: f32[9,8,4], index: 1, kind: input, shape index: {}]
  %s2 = inlined_call_operand.vmem [shape: f32[2,8,288], index: 2, kind: output, shape index: {}]
  %s3 = sld [smem:[#allocation0]]
  $region41: #{upsample_pallas.1} parent=0
    _
  %s5 = ssub.s32 1, %s3
  %s6 = scalar_select 0, %s5, %s3
  loop: start=0, step=1, limit=4
  $region2: #{upsample_pallas.1} parent=0 // loop_pre_header
    _
  $region3: #{upsample_pallas.1} parent=0 // loop_header
    %s8 = sphi 0, %s12
    %p9 = scmp.ge.s32.totalorder %s8, 4
    %s18 = sphi 0, %s20
    %s21 = sphi 0, %s18
    %s22 = sphi 0, %s21
    %s38 = sphi 0, %s22
    %s42 = sphi 0, %s42
    %s44 = sphi 0, %s42
    %s45 = sphi 0, %s44
    %s59 = sphi 0, %s45
    %s65 = sphi 0, %s67
    %s68 = sphi 0, %s65
    %s69 = sphi 0, %s68
    %s85 = sphi 0, %s69
  $region4: #{upsample_pallas.1} parent=0 // loop_header_branch
    %11 = sbr.rel (%p9) target = $region8
  $region5: #{upsample_pallas.1} parent=0 // loop_body
    %s13 = ssub.s32 %s8, 1
    %s14 = ssub.s32 %s8, 2
    %s15 = sadd.s32 %s8, 1
    %s16 = ssub.s32 %s8, %s15
    %p17 = scmp.eq.s32.totalorder %s16, 0
    %s19 = sadd.s32 %s18, 1
    %s20 = scalar_select %p17, %s18, %s19
    %p23 = pneg %p17
    %p24 = scmp.eq.s32.totalorder %s8, 1
    %p25 = por %p23, %p24
    %p26 = scmp.ne.s32.totalorder %s18, %s21
    %p27 = scmp.eq.s32.totalorder %s8, 0
    %p28 = por %p26, %p27
    %p29 = scmp.ne.s32.totalorder %s18, %s21
    %p30 = scmp.eq.s32.totalorder %s13, 1
    %p31 = por %p29, %p30
    %p32 = scmp.ne.s32.totalorder %s21, %s22
    %p33 = scmp.eq.s32.totalorder %s13, 0
    %p34 = por %p32, %p33
    %p35 = scmp.ne.s32.totalorder %s21, %s22
    %p36 = scmp.eq.s32.totalorder %s14, 1
    %p37 = por %p35, %p36
    %p39 = scmp.ne.s32.totalorder %s22, %s38
    %p40 = scmp.eq.s32.totalorder %s14, 0
    %p41 = por %p39, %p40
    %s43 = sadd.s32 %s42, 1
    %p46 = scmp.eq.s32.totalorder %s8, 1
    %p47 = scmp.ne.s32.totalorder %s42, %s44
    %p48 = scmp.eq.s32.totalorder %s8, 0
    %p49 = por %p47, %p48
    %p50 = scmp.ne.s32.totalorder %s42, %s44
    %p51 = scmp.eq.s32.totalorder %s13, 1
    %p52 = por %p50, %p51
    %p53 = scmp.ne.s32.totalorder %s44, %s45
    %p54 = scmp.eq.s32.totalorder %s13, 0
    %p55 = por %p53, %p54
    %p56 = scmp.ne.s32.totalorder %s44, %s45
    %p57 = scmp.eq.s32.totalorder %s14, 1
    %p58 = por %p56, %p57
    %p60 = scmp.ne.s32.totalorder %s45, %s59
    %p61 = scmp.eq.s32.totalorder %s14, 0
    %p62 = por %p60, %p61
    %s63 = ssub.s32 %s8, %s15
    %p64 = scmp.eq.s32.totalorder %s63, 0
    %s66 = sadd.s32 %s65, 1
    %s67 = scalar_select %p64, %s65, %s66
    %p70 = pneg %p64
    %p71 = scmp.eq.s32.totalorder %s8, 1
    %p72 = por %p70, %p71
    %p73 = scmp.ne.s32.totalorder %s65, %s68
    %p74 = scmp.eq.s32.totalorder %s8, 0
    %p75 = por %p73, %p74
    %p76 = scmp.ne.s32.totalorder %s65, %s68
    %p77 = scmp.eq.s32.totalorder %s13, 1
    %p78 = por %p76, %p77
    %p79 = scmp.ne.s32.totalorder %s68, %s69
    %p80 = scmp.eq.s32.totalorder %s13, 0
    %p81 = por %p79, %p80
    %p82 = scmp.ne.s32.totalorder %s68, %s69
    %p83 = scmp.eq.s32.totalorder %s14, 1
    %p84 = por %p82, %p83
    %p86 = scmp.ne.s32.totalorder %s69, %s85
    %p87 = scmp.eq.s32.totalorder %s14, 0
    %p88 = por %p86, %p87
    %p89 = scmp.le.s32.totalorder 1, %s8
    %p90 = scmp.lt.s32.totalorder %s8, 3
    %p91 = pnand %p89, %p90
    %p92 = pneg %p91
    // Predicated region
    $region9: #{upsample_pallas.1} parent=5 // pred_check
      _
    $region10: #{upsample_pallas.1} parent=5 // pred_check_branch
      %94 = sbr.rel (%p91) target = $region12
    $region11: #{upsample_pallas.1} parent=5 // pred_region
      %s95 = ssub.s32 %s8, 1
      // Predicated region
      $region13: #{upsample_pallas.1} parent=11 // pred_check
        %p96 = pneg %p55
      $region14: #{upsample_pallas.1} parent=11 // pred_check_branch
        %98 = sbr.rel (%p96) target = $region16
      $region15: #{upsample_pallas.1} parent=11 // pred_region
        _
      $region16: #{upsample_pallas.1} parent=11 // pred_fallthru
        _
    $region12: #{upsample_pallas.1} parent=5 // pred_fallthru
      _
    %p99 = scmp.lt.s32.totalorder %s8, 2
    // Predicated region
    $region17: #{upsample_pallas.1} parent=5 // pred_check
      %p100 = pneg %p99
    $region18: #{upsample_pallas.1} parent=5 // pred_check_branch
      %102 = sbr.rel (%p100) target = $region20
    $region19: #{upsample_pallas.1} parent=5 // pred_region
      // Predicated region
      $region21: #{upsample_pallas.1} parent=19 // pred_check
        %p103 = pneg %p28
      $region22: #{upsample_pallas.1} parent=19 // pred_check_branch
        %105 = sbr.rel (%p103) target = $region24
      $region23: #{upsample_pallas.1} parent=19 // pred_region
        %p106 = scmp.lt.s32.totalorder %s8, 1
        %s107 = scalar_select %p106, %s8, 1
        %s108 = smul.addr %s107, 3
        %s109 = smul.addr %s108, 4
        %s110 = scalar_lea.vmem %s0, %s109
      $region24: #{upsample_pallas.1} parent=19 // pred_fallthru
        _
    $region20: #{upsample_pallas.1} parent=5 // pred_fallthru
      _
    %p111 = scmp.le.s32.totalorder 1, %s8
    %p112 = scmp.lt.s32.totalorder %s8, 3
    %p113 = pnand %p111, %p112
    %p114 = pneg %p113
    // Predicated region
    $region25: #{upsample_pallas.1} parent=5 // pred_check
      _
    $region26: #{upsample_pallas.1} parent=5 // pred_check_branch
      %116 = sbr.rel (%p113) target = $region28
    $region27: #{upsample_pallas.1} parent=5 // pred_region
      %s117 = ssub.s32 %s8, 1
      %p118 = scmp.lt.s32.totalorder %s13, 1
      %s119 = scalar_select %p118, %s13, 1
      %s120 = smul.addr %s119, 3
      %s121 = smul.addr %s120, 4
      %s122 = scalar_lea.vmem %s0, %s121
      %p123 = pneg %p34
      %p124 = pneg %p31
      %p125 = pneg %p55
      %p126 = pneg %p52
      %p127 = pneg %p81
      %p128 = pneg %p78
      %p129 = scmp.lt.s32.totalorder %s13, 1
      %s130 = scalar_select %p129, %s13, 1
      %s131 = smul.addr %s130, 3
      %s132 = smul.addr %s131, 8
      %s133 = scalar_lea.vmem %s2, %s132
      %p134 = scmp.lt.s32.totalorder %s13, 1
      %s135 = scalar_select %p134, %s13, 1
      %s136 = smul.addr %s135, 3
      %s137 = smul.addr %s136, 4
      %s138 = scalar_lea.vmem %s0, %s137
      %p139 = scmp.lt.s32.totalorder %s13, 1
      %s140 = scalar_select %p139, %s13, 1
      %s141 = smul.addr %s140, 3
      %s142 = smul.addr %s141, 8
      %s143 = scalar_lea.vmem %s2, %s142
      %v144 = vld [vmem:[%s138] sm:$0xff]
      %v145 = vld [vmem:[%s138 + $0x8] sm:$0xf]
      %v146 = vld [vmem:[%s1] sm:$0xff]
      %s147 = scalar_lea.vmem %s1, 8
      %v148 = vld [vmem:[%s147] sm:$0xff]
      %151 = vst [vmem:[#allocation1] ss:$2 sm:$0xff] %v144
      %s152 = scalar_lea.vmem [#allocation1], 16
      %153 = vst [vmem:[%s152] ss:$2 sm:$0xff] %v145
      %v154 = vld.sshfl [vmem:[#allocation1] sm:$0xff pattern:$0x75316420]
      %v155 = vld.sshfl [vmem:[#allocation1 + $0x8] sm:$0xff pattern:$0x75316420]
      %v156 = vld.sshfl [vmem:[#allocation1 + $0x10] sm:$0xff pattern:$0x75316420]
      %157 = vrot.lane.b32.xlu0 %v154, 127
      %v158 = vpop.permute.xlu0 %157
      %159 = vrot.lane.b32.xlu0 %v155, 127
      %v160 = vpop.permute.xlu0 %159
      %161 = vrot.lane.b32.xlu0 %v156, 127
      %v162 = vpop.permute.xlu0 %161
      %vm163 = vcmask 1039360
      %v164 = vsel %vm163, %v158, %v160
      %v165 = vsel %vm163, %v160, %v162
      %vm166 = vcmask 31744
      %v168 = vsel %vm166, %v148, 0
      %vm170 = vcmask 1043456
      %v171 = vsel %vm170, %v164, 0
      %v173 = vsel %vm170, %v165, 0
      %v175 = vsel %vm170, %v162, 0
      %177 = vmatpush.msra.mxu0 0.0
      %178 = vmatpush.msra.mxu0 0.0
      %179 = vmatpush.msra.mxu0 0.0
      %180 = vmatpush.msra.mxu0 0.0
      %181 = vmatpush.msra.mxu0 0.0
      %182 = vmatpush.msra.mxu0 0.0
      %183 = vmatpush.msra.mxu0 0.0
      %184 = vmatpush.msra.mxu0 0.0
      %185 = vmatpush.msra.mxu0 0.0
      %186 = vmatpush.msra.mxu0 0.0
      %187 = vmatpush.msra.mxu0 0.0
      %188 = vmatpush.msra.mxu0 0.0
      %189 = vmatpush.msra.mxu0 0.0
      %190 = vmatpush.msra.mxu0 0.0
      %191 = vmatpush.msra.mxu0 0.0
      %192 = vmatpush.msra.mxu0 %v171
      %193 = vmatmul.f32.gmra.mxu0 %v168
      %v194 = vpop.f32.mrf.mxu0
      %v195 = vadd.f32 0.0, %v194
      %196 = vdwg.mxu0
      %197 = vmatpush.msra.mxu0 0.0
      %198 = vmatpush.msra.mxu0 0.0
      %199 = vmatpush.msra.mxu0 0.0
      %200 = vmatpush.msra.mxu0 0.0
      %201 = vmatpush.msra.mxu0 0.0
      %202 = vmatpush.msra.mxu0 0.0
      %203 = vmatpush.msra.mxu0 0.0
      %204 = vmatpush.msra.mxu0 0.0
      %205 = vmatpush.msra.mxu0 0.0
      %206 = vmatpush.msra.mxu0 0.0
      %207 = vmatpush.msra.mxu0 0.0
      %208 = vmatpush.msra.mxu0 0.0
      %209 = vmatpush.msra.mxu0 0.0
      %210 = vmatpush.msra.mxu0 0.0
      %211 = vmatpush.msra.mxu0 0.0
      %212 = vmatpush.msra.mxu0 %v173
      %213 = vmatmul.f32.gmra.mxu0 %v168
      %v214 = vpop.f32.mrf.mxu0
      %v215 = vadd.f32 0.0, %v214
      %216 = vdwg.mxu0
      %217 = vmatpush.msra.mxu0 0.0
      %218 = vmatpush.msra.mxu0 0.0
      %219 = vmatpush.msra.mxu0 0.0
      %220 = vmatpush.msra.mxu0 0.0
      %221 = vmatpush.msra.mxu0 0.0
      %222 = vmatpush.msra.mxu0 0.0
      %223 = vmatpush.msra.mxu0 0.0
      %224 = vmatpush.msra.mxu0 0.0
      %225 = vmatpush.msra.mxu0 0.0
      %226 = vmatpush.msra.mxu0 0.0
      %227 = vmatpush.msra.mxu0 0.0
      %228 = vmatpush.msra.mxu0 0.0
      %229 = vmatpush.msra.mxu0 0.0
      %230 = vmatpush.msra.mxu0 0.0
      %231 = vmatpush.msra.mxu0 0.0
      %232 = vmatpush.msra.mxu0 %v175
      %233 = vmatmul.f32.gmra.mxu0 %v168
      %v234 = vpop.f32.mrf.mxu0
      %v235 = vadd.f32 0.0, %v234
      %236 = vdwg.mxu0
      %237 = vst [vmem:[#allocation1] ss:$2 sm:$0xff] %v144
      %s238 = scalar_lea.vmem [#allocation1], 16
      %239 = vst [vmem:[%s238] ss:$2 sm:$0xff] %v145
      %v240 = vld.sshfl [vmem:[#allocation1] sm:$0xff pattern:$0x75316420]
      %v241 = vld.sshfl [vmem:[#allocation1 + $0x8] sm:$0xff pattern:$0x75316420]
      %v242 = vld.sshfl [vmem:[#allocation1 + $0x10] sm:$0xff pattern:$0x75316420]
      %v244 = vsel %vm166, %v146, 0
      %v246 = vsel %vm170, %v240, 0
      %v248 = vsel %vm170, %v241, 0
      %v250 = vsel %vm170, %v242, 0
      %252 = vmatpush.msra.mxu0 0.0
      %253 = vmatpush.msra.mxu0 0.0
      %254 = vmatpush.msra.mxu0 0.0
      %255 = vmatpush.msra.mxu0 0.0
      %256 = vmatpush.msra.mxu0 0.0
      %257 = vmatpush.msra.mxu0 0.0
      %258 = vmatpush.msra.mxu0 0.0
      %259 = vmatpush.msra.mxu0 0.0
      %260 = vmatpush.msra.mxu0 0.0
      %261 = vmatpush.msra.mxu0 0.0
      %262 = vmatpush.msra.mxu0 0.0
      %263 = vmatpush.msra.mxu0 0.0
      %264 = vmatpush.msra.mxu0 0.0
      %265 = vmatpush.msra.mxu0 0.0
      %266 = vmatpush.msra.mxu0 0.0
      %267 = vmatpush.msra.mxu0 %v246
      %268 = vmatmul.f32.gmra.mxu0 %v244
      %v269 = vpop.f32.mrf.mxu0
      %v270 = vadd.f32 %v195, %v269
      %271 = vdwg.mxu0
      %272 = vmatpush.msra.mxu0 0.0
      %273 = vmatpush.msra.mxu0 0.0
      %274 = vmatpush.msra.mxu0 0.0
      %275 = vmatpush.msra.mxu0 0.0
      %276 = vmatpush.msra.mxu0 0.0
      %277 = vmatpush.msra.mxu0 0.0
      %278 = vmatpush.msra.mxu0 0.0
      %279 = vmatpush.msra.mxu0 0.0
      %280 = vmatpush.msra.mxu0 0.0
      %281 = vmatpush.msra.mxu0 0.0
      %282 = vmatpush.msra.mxu0 0.0
      %283 = vmatpush.msra.mxu0 0.0
      %284 = vmatpush.msra.mxu0 0.0
      %285 = vmatpush.msra.mxu0 0.0
      %286 = vmatpush.msra.mxu0 0.0
      %287 = vmatpush.msra.mxu0 %v248
      %288 = vmatmul.f32.gmra.mxu0 %v244
      %v289 = vpop.f32.mrf.mxu0
      %v290 = vadd.f32 %v215, %v289
      %291 = vdwg.mxu0
      %292 = vmatpush.msra.mxu0 0.0
      %293 = vmatpush.msra.mxu0 0.0
      %294 = vmatpush.msra.mxu0 0.0
      %295 = vmatpush.msra.mxu0 0.0
      %296 = vmatpush.msra.mxu0 0.0
      %297 = vmatpush.msra.mxu0 0.0
      %298 = vmatpush.msra.mxu0 0.0
      %299 = vmatpush.msra.mxu0 0.0
      %300 = vmatpush.msra.mxu0 0.0
      %301 = vmatpush.msra.mxu0 0.0
      %302 = vmatpush.msra.mxu0 0.0
      %303 = vmatpush.msra.mxu0 0.0
      %304 = vmatpush.msra.mxu0 0.0
      %305 = vmatpush.msra.mxu0 0.0
      %306 = vmatpush.msra.mxu0 0.0
      %307 = vmatpush.msra.mxu0 %v250
      %308 = vmatmul.f32.gmra.mxu0 %v244
      %v309 = vpop.f32.mrf.mxu0
      %v310 = vadd.f32 %v235, %v309
      %311 = vdwg.mxu0
      %s312 = scalar_lea.vmem %s1, 16
      %v313 = vld [vmem:[%s312] sm:$0xff]
      %314 = vst [vmem:[#allocation1] ss:$2 sm:$0xff] %v144
      %s315 = scalar_lea.vmem [#allocation1], 16
      %316 = vst [vmem:[%s315] ss:$2 sm:$0xff] %v145
      %v317 = vld.sshfl [vmem:[#allocation1] sm:$0xff pattern:$0x75316420]
      %v318 = vld.sshfl [vmem:[#allocation1 + $0x8] sm:$0xff pattern:$0x75316420]
      %v319 = vld.sshfl [vmem:[#allocation1 + $0x10] sm:$0xff pattern:$0x75316420]
      %320 = vrot.lane.b32.xlu0 %v317, 126
      %v321 = vpop.permute.xlu0 %320
      %322 = vrot.lane.b32.xlu0 %v318, 126
      %v323 = vpop.permute.xlu0 %322
      %324 = vrot.lane.b32.xlu0 %v319, 126
      %v325 = vpop.permute.xlu0 %324
      %vm326 = vcmask 1031168
      %v327 = vsel %vm326, %v321, %v323
      %v328 = vsel %vm326, %v323, %v325
      %v330 = vsel %vm166, %v313, 0
      %v332 = vsel %vm170, %v327, 0
      %v334 = vsel %vm170, %v328, 0
      %v336 = vsel %vm170, %v325, 0
      %338 = vmatpush.msra.mxu0 0.0
      %339 = vmatpush.msra.mxu0 0.0
      %340 = vmatpush.msra.mxu0 0.0
      %341 = vmatpush.msra.mxu0 0.0
      %342 = vmatpush.msra.mxu0 0.0
      %343 = vmatpush.msra.mxu0 0.0
      %344 = vmatpush.msra.mxu0 0.0
      %345 = vmatpush.msra.mxu0 0.0
      %346 = vmatpush.msra.mxu0 0.0
      %347 = vmatpush.msra.mxu0 0.0
      %348 = vmatpush.msra.mxu0 0.0
      %349 = vmatpush.msra.mxu0 0.0
      %350 = vmatpush.msra.mxu0 0.0
      %351 = vmatpush.msra.mxu0 0.0
      %352 = vmatpush.msra.mxu0 0.0
      %353 = vmatpush.msra.mxu0 %v332
      %354 = vmatmul.f32.gmra.mxu0 %v330
      %v355 = vpop.f32.mrf.mxu0
      %v356 = vadd.f32 0.0, %v355
      %357 = vdwg.mxu0
      %358 = vmatpush.msra.mxu0 0.0
      %359 = vmatpush.msra.mxu0 0.0
      %360 = vmatpush.msra.mxu0 0.0
      %361 = vmatpush.msra.mxu0 0.0
      %362 = vmatpush.msra.mxu0 0.0
      %363 = vmatpush.msra.mxu0 0.0
      %364 = vmatpush.msra.mxu0 0.0
      %365 = vmatpush.msra.mxu0 0.0
      %366 = vmatpush.msra.mxu0 0.0
      %367 = vmatpush.msra.mxu0 0.0
      %368 = vmatpush.msra.mxu0 0.0
      %369 = vmatpush.msra.mxu0 0.0
      %370 = vmatpush.msra.mxu0 0.0
      %371 = vmatpush.msra.mxu0 0.0
      %372 = vmatpush.msra.mxu0 0.0
      %373 = vmatpush.msra.mxu0 %v334
      %374 = vmatmul.f32.gmra.mxu0 %v330
      %v375 = vpop.f32.mrf.mxu0
      %v376 = vadd.f32 0.0, %v375
      %377 = vdwg.mxu0
      %378 = vmatpush.msra.mxu0 0.0
      %379 = vmatpush.msra.mxu0 0.0
      %380 = vmatpush.msra.mxu0 0.0
      %381 = vmatpush.msra.mxu0 0.0
      %382 = vmatpush.msra.mxu0 0.0
      %383 = vmatpush.msra.mxu0 0.0
      %384 = vmatpush.msra.mxu0 0.0
      %385 = vmatpush.msra.mxu0 0.0
      %386 = vmatpush.msra.mxu0 0.0
      %387 = vmatpush.msra.mxu0 0.0
      %388 = vmatpush.msra.mxu0 0.0
      %389 = vmatpush.msra.mxu0 0.0
      %390 = vmatpush.msra.mxu0 0.0
      %391 = vmatpush.msra.mxu0 0.0
      %392 = vmatpush.msra.mxu0 0.0
      %393 = vmatpush.msra.mxu0 %v336
      %394 = vmatmul.f32.gmra.mxu0 %v330
      %v395 = vpop.f32.mrf.mxu0
      %v396 = vadd.f32 0.0, %v395
      %397 = vdwg.mxu0
      %v398 = vadd.f32 %v270, %v356
      %v399 = vadd.f32 %v290, %v376
      %v400 = vadd.f32 %v310, %v396
      %s401 = scalar_lea.vmem %s1, 24
      %v402 = vld [vmem:[%s401] sm:$0xff]
      %403 = vst [vmem:[#allocation1] ss:$2 sm:$0xff] %v144
      %s404 = scalar_lea.vmem [#allocation1], 16
      %405 = vst [vmem:[%s404] ss:$2 sm:$0xff] %v145
      %v406 = vld.sshfl [vmem:[#allocation1] sm:$0xff pattern:$0x75316420]
      %v407 = vld.sshfl [vmem:[#allocation1 + $0x8] sm:$0xff pattern:$0x75316420]
      %v408 = vld.sshfl [vmem:[#allocation1 + $0x10] sm:$0xff pattern:$0x75316420]
      %409 = vrot.lane.b32.xlu0 %v406, 110
      %v410 = vpop.permute.xlu0 %409
      %411 = vrot.lane.b32.xlu0 %v407, 110
      %v412 = vpop.permute.xlu0 %411
      %413 = vrot.lane.b32.xlu0 %v408, 110
      %v414 = vpop.permute.xlu0 %413
      %vm415 = vcmask 900096
      %v416 = vsel %vm415, %v410, %v412
      %v417 = vsel %vm415, %v412, %v414
      %v419 = vsel %vm166, %v402, 0
      %v421 = vsel %vm170, %v416, 0
      %v423 = vsel %vm170, %v417, 0
      %v425 = vsel %vm170, %v414, 0
      %427 = vmatpush.msra.mxu0 0.0
      %428 = vmatpush.msra.mxu0 0.0
      %429 = vmatpush.msra.mxu0 0.0
      %430 = vmatpush.msra.mxu0 0.0
      %431 = vmatpush.msra.mxu0 0.0
      %432 = vmatpush.msra.mxu0 0.0
      %433 = vmatpush.msra.mxu0 0.0
      %434 = vmatpush.msra.mxu0 0.0
      %435 = vmatpush.msra.mxu0 0.0
      %436 = vmatpush.msra.mxu0 0.0
      %437 = vmatpush.msra.mxu0 0.0
      %438 = vmatpush.msra.mxu0 0.0
      %439 = vmatpush.msra.mxu0 0.0
      %440 = vmatpush.msra.mxu0 0.0
      %441 = vmatpush.msra.mxu0 0.0
      %442 = vmatpush.msra.mxu0 %v421
      %443 = vmatmul.f32.gmra.mxu0 %v419
      %v444 = vpop.f32.mrf.mxu0
      %v445 = vadd.f32 0.0, %v444
      %446 = vdwg.mxu0
      %447 = vmatpush.msra.mxu0 0.0
      %448 = vmatpush.msra.mxu0 0.0
      %449 = vmatpush.msra.mxu0 0.0
      %450 = vmatpush.msra.mxu0 0.0
      %451 = vmatpush.msra.mxu0 0.0
      %452 = vmatpush.msra.mxu0 0.0
      %453 = vmatpush.msra.mxu0 0.0
      %454 = vmatpush.msra.mxu0 0.0
      %455 = vmatpush.msra.mxu0 0.0
      %456 = vmatpush.msra.mxu0 0.0
      %457 = vmatpush.msra.mxu0 0.0
      %458 = vmatpush.msra.mxu0 0.0
      %459 = vmatpush.msra.mxu0 0.0
      %460 = vmatpush.msra.mxu0 0.0
      %461 = vmatpush.msra.mxu0 0.0
      %462 = vmatpush.msra.mxu0 %v423
      %463 = vmatmul.f32.gmra.mxu0 %v419
      %v464 = vpop.f32.mrf.mxu0
      %v465 = vadd.f32 0.0, %v464
      %466 = vdwg.mxu0
      %467 = vmatpush.msra.mxu0 0.0
      %468 = vmatpush.msra.mxu0 0.0
      %469 = vmatpush.msra.mxu0 0.0
      %470 = vmatpush.msra.mxu0 0.0
      %471 = vmatpush.msra.mxu0 0.0
      %472 = vmatpush.msra.mxu0 0.0
      %473 = vmatpush.msra.mxu0 0.0
      %474 = vmatpush.msra.mxu0 0.0
      %475 = vmatpush.msra.mxu0 0.0
      %476 = vmatpush.msra.mxu0 0.0
      %477 = vmatpush.msra.mxu0 0.0
      %478 = vmatpush.msra.mxu0 0.0
      %479 = vmatpush.msra.mxu0 0.0
      %480 = vmatpush.msra.mxu0 0.0
      %481 = vmatpush.msra.mxu0 0.0
      %482 = vmatpush.msra.mxu0 %v425
      %483 = vmatmul.f32.gmra.mxu0 %v419
      %v484 = vpop.f32.mrf.mxu0
      %v485 = vadd.f32 0.0, %v484
      %486 = vdwg.mxu0
      %v487 = vadd.f32 %v398, %v445
      %v488 = vadd.f32 %v399, %v465
      %v489 = vadd.f32 %v400, %v485
      %s490 = scalar_lea.vmem %s1, 32
      %v491 = vld [vmem:[%s490] sm:$0xff]
      %492 = vst [vmem:[#allocation1] ss:$2 sm:$0xff] %v144
      %s493 = scalar_lea.vmem [#allocation1], 16
      %494 = vst [vmem:[%s493] ss:$2 sm:$0xff] %v145
      %v495 = vld.sshfl [vmem:[#allocation1] sm:$0xff pattern:$0x75316420]
      %v496 = vld.sshfl [vmem:[#allocation1 + $0x8] sm:$0xff pattern:$0x75316420]
      %v497 = vld.sshfl [vmem:[#allocation1 + $0x10] sm:$0xff pattern:$0x75316420]
      %498 = vrot.lane.b32.xlu0 %v495, 109
      %v499 = vpop.permute.xlu0 %498
      %500 = vrot.lane.b32.xlu0 %v496, 109
      %v501 = vpop.permute.xlu0 %500
      %502 = vrot.lane.b32.xlu0 %v497, 109
      %v503 = vpop.permute.xlu0 %502
      %vm504 = vcmask 891904
      %v505 = vsel %vm504, %v499, %v501
      %v506 = vsel %vm504, %v501, %v503
      %v508 = vsel %vm166, %v491, 0
      %v510 = vsel %vm170, %v505, 0
      %v512 = vsel %vm170, %v506, 0
      %v514 = vsel %vm170, %v503, 0
      %516 = vmatpush.msra.mxu0 0.0
      %517 = vmatpush.msra.mxu0 0.0
      %518 = vmatpush.msra.mxu0 0.0
      %519 = vmatpush.msra.mxu0 0.0
      %520 = vmatpush.msra.mxu0 0.0
      %521 = vmatpush.msra.mxu0 0.0
      %522 = vmatpush.msra.mxu0 0.0
      %523 = vmatpush.msra.mxu0 0.0
      %524 = vmatpush.msra.mxu0 0.0
      %525 = vmatpush.msra.mxu0 0.0
      %526 = vmatpush.msra.mxu0 0.0
      %527 = vmatpush.msra.mxu0 0.0
      %528 = vmatpush.msra.mxu0 0.0
      %529 = vmatpush.msra.mxu0 0.0
      %530 = vmatpush.msra.mxu0 0.0
      %531 = vmatpush.msra.mxu0 %v510
      %532 = vmatmul.f32.gmra.mxu0 %v508
      %v533 = vpop.f32.mrf.mxu0
      %v534 = vadd.f32 0.0, %v533
      %535 = vdwg.mxu0
      %536 = vmatpush.msra.mxu0 0.0
      %537 = vmatpush.msra.mxu0 0.0
      %538 = vmatpush.msra.mxu0 0.0
      %539 = vmatpush.msra.mxu0 0.0
      %540 = vmatpush.msra.mxu0 0.0
      %541 = vmatpush.msra.mxu0 0.0
      %542 = vmatpush.msra.mxu0 0.0
      %543 = vmatpush.msra.mxu0 0.0
      %544 = vmatpush.msra.mxu0 0.0
      %545 = vmatpush.msra.mxu0 0.0
      %546 = vmatpush.msra.mxu0 0.0
      %547 = vmatpush.msra.mxu0 0.0
      %548 = vmatpush.msra.mxu0 0.0
      %549 = vmatpush.msra.mxu0 0.0
      %550 = vmatpush.msra.mxu0 0.0
      %551 = vmatpush.msra.mxu0 %v512
      %552 = vmatmul.f32.gmra.mxu0 %v508
      %v553 = vpop.f32.mrf.mxu0
      %v554 = vadd.f32 0.0, %v553
      %555 = vdwg.mxu0
      %556 = vmatpush.msra.mxu0 0.0
      %557 = vmatpush.msra.mxu0 0.0
      %558 = vmatpush.msra.mxu0 0.0
      %559 = vmatpush.msra.mxu0 0.0
      %560 = vmatpush.msra.mxu0 0.0
      %561 = vmatpush.msra.mxu0 0.0
      %562 = vmatpush.msra.mxu0 0.0
      %563 = vmatpush.msra.mxu0 0.0
      %564 = vmatpush.msra.mxu0 0.0
      %565 = vmatpush.msra.mxu0 0.0
      %566 = vmatpush.msra.mxu0 0.0
      %567 = vmatpush.msra.mxu0 0.0
      %568 = vmatpush.msra.mxu0 0.0
      %569 = vmatpush.msra.mxu0 0.0
      %570 = vmatpush.msra.mxu0 0.0
      %571 = vmatpush.msra.mxu0 %v514
      %572 = vmatmul.f32.gmra.mxu0 %v508
      %v573 = vpop.f32.mrf.mxu0
      %v574 = vadd.f32 0.0, %v573
      %575 = vdwg.mxu0
      %v576 = vadd.f32 %v487, %v534
      %v577 = vadd.f32 %v488, %v554
      %v578 = vadd.f32 %v489, %v574
      %s579 = scalar_lea.vmem %s1, 40
      %v580 = vld [vmem:[%s579] sm:$0xff]
      %581 = vst [vmem:[#allocation1] ss:$2 sm:$0xff] %v144
      %s582 = scalar_lea.vmem [#allocation1], 16
      %583 = vst [vmem:[%s582] ss:$2 sm:$0xff] %v145
      %v584 = vld.sshfl [vmem:[#allocation1] sm:$0xff pattern:$0x75316420]
      %v585 = vld.sshfl [vmem:[#allocation1 + $0x8] sm:$0xff pattern:$0x75316420]
      %v586 = vld.sshfl [vmem:[#allocation1 + $0x10] sm:$0xff pattern:$0x75316420]
      %587 = vrot.lane.b32.xlu0 %v584, 108
      %v588 = vpop.permute.xlu0 %587
      %589 = vrot.lane.b32.xlu0 %v585, 108
      %v590 = vpop.permute.xlu0 %589
      %591 = vrot.lane.b32.xlu0 %v586, 108
      %v592 = vpop.permute.xlu0 %591
      %vm593 = vcmask 883712
      %v594 = vsel %vm593, %v588, %v590
      %v595 = vsel %vm593, %v590, %v592
      %v597 = vsel %vm166, %v580, 0
      %v599 = vsel %vm170, %v594, 0
      %v601 = vsel %vm170, %v595, 0
      %v603 = vsel %vm170, %v592, 0
      %605 = vmatpush.msra.mxu0 0.0
      %606 = vmatpush.msra.mxu0 0.0
      %607 = vmatpush.msra.mxu0 0.0
      %608 = vmatpush.msra.mxu0 0.0
      %609 = vmatpush.msra.mxu0 0.0
      %610 = vmatpush.msra.mxu0 0.0
      %611 = vmatpush.msra.mxu0 0.0
      %612 = vmatpush.msra.mxu0 0.0
      %613 = vmatpush.msra.mxu0 0.0
      %614 = vmatpush.msra.mxu0 0.0
      %615 = vmatpush.msra.mxu0 0.0
      %616 = vmatpush.msra.mxu0 0.0
      %617 = vmatpush.msra.mxu0 0.0
      %618 = vmatpush.msra.mxu0 0.0
      %619 = vmatpush.msra.mxu0 0.0
      %620 = vmatpush.msra.mxu0 %v599
      %621 = vmatmul.f32.gmra.mxu0 %v597
      %v622 = vpop.f32.mrf.mxu0
      %v623 = vadd.f32 0.0, %v622
      %624 = vdwg.mxu0
      %625 = vmatpush.msra.mxu0 0.0
      %626 = vmatpush.msra.mxu0 0.0
      %627 = vmatpush.msra.mxu0 0.0
      %628 = vmatpush.msra.mxu0 0.0
      %629 = vmatpush.msra.mxu0 0.0
      %630 = vmatpush.msra.mxu0 0.0
      %631 = vmatpush.msra.mxu0 0.0
      %632 = vmatpush.msra.mxu0 0.0
      %633 = vmatpush.msra.mxu0 0.0
      %634 = vmatpush.msra.mxu0 0.0
      %635 = vmatpush.msra.mxu0 0.0
      %636 = vmatpush.msra.mxu0 0.0
      %637 = vmatpush.msra.mxu0 0.0
      %638 = vmatpush.msra.mxu0 0.0
      %639 = vmatpush.msra.mxu0 0.0
      %640 = vmatpush.msra.mxu0 %v601
      %641 = vmatmul.f32.gmra.mxu0 %v597
      %v642 = vpop.f32.mrf.mxu0
      %v643 = vadd.f32 0.0, %v642
      %644 = vdwg.mxu0
      %645 = vmatpush.msra.mxu0 0.0
      %646 = vmatpush.msra.mxu0 0.0
      %647 = vmatpush.msra.mxu0 0.0
      %648 = vmatpush.msra.mxu0 0.0
      %649 = vmatpush.msra.mxu0 0.0
      %650 = vmatpush.msra.mxu0 0.0
      %651 = vmatpush.msra.mxu0 0.0
      %652 = vmatpush.msra.mxu0 0.0
      %653 = vmatpush.msra.mxu0 0.0
      %654 = vmatpush.msra.mxu0 0.0
      %655 = vmatpush.msra.mxu0 0.0
      %656 = vmatpush.msra.mxu0 0.0
      %657 = vmatpush.msra.mxu0 0.0
      %658 = vmatpush.msra.mxu0 0.0
      %659 = vmatpush.msra.mxu0 0.0
      %660 = vmatpush.msra.mxu0 %v603
      %661 = vmatmul.f32.gmra.mxu0 %v597
      %v662 = vpop.f32.mrf.mxu0
      %v663 = vadd.f32 0.0, %v662
      %664 = vdwg.mxu0
      %v665 = vadd.f32 %v576, %v623
      %v666 = vadd.f32 %v577, %v643
      %v667 = vadd.f32 %v578, %v663
      %s668 = scalar_lea.vmem %s1, 48
      %v669 = vld [vmem:[%s668] sm:$0xff]
      %670 = vst [vmem:[#allocation1] ss:$2 sm:$0xff] %v144
      %s671 = scalar_lea.vmem [#allocation1], 16
      %672 = vst [vmem:[%s671] ss:$2 sm:$0xff] %v145
      %v673 = vld.sshfl [vmem:[#allocation1] sm:$0xff pattern:$0x75316420]
      %v674 = vld.sshfl [vmem:[#allocation1 + $0x8] sm:$0xff pattern:$0x75316420]
      %v675 = vld.sshfl [vmem:[#allocation1 + $0x10] sm:$0xff pattern:$0x75316420]
      %676 = vrot.lane.b32.xlu0 %v673, 92
      %v677 = vpop.permute.xlu0 %676
      %678 = vrot.lane.b32.xlu0 %v674, 92
      %v679 = vpop.permute.xlu0 %678
      %680 = vrot.lane.b32.xlu0 %v675, 92
      %v681 = vpop.permute.xlu0 %680
      %vm682 = vcmask 752640
      %v683 = vsel %vm682, %v677, %v679
      %v684 = vsel %vm682, %v679, %v681
      %v686 = vsel %vm166, %v669, 0
      %v688 = vsel %vm170, %v683, 0
      %v690 = vsel %vm170, %v684, 0
      %v692 = vsel %vm170, %v681, 0
      %694 = vmatpush.msra.mxu0 0.0
      %695 = vmatpush.msra.mxu0 0.0
      %696 = vmatpush.msra.mxu0 0.0
      %697 = vmatpush.msra.mxu0 0.0
      %698 = vmatpush.msra.mxu0 0.0
      %699 = vmatpush.msra.mxu0 0.0
      %700 = vmatpush.msra.mxu0 0.0
      %701 = vmatpush.msra.mxu0 0.0
      %702 = vmatpush.msra.mxu0 0.0
      %703 = vmatpush.msra.mxu0 0.0
      %704 = vmatpush.msra.mxu0 0.0
      %705 = vmatpush.msra.mxu0 0.0
      %706 = vmatpush.msra.mxu0 0.0
      %707 = vmatpush.msra.mxu0 0.0
      %708 = vmatpush.msra.mxu0 0.0
      %709 = vmatpush.msra.mxu0 %v688
      %710 = vmatmul.f32.gmra.mxu0 %v686
      %v711 = vpop.f32.mrf.mxu0
      %v712 = vadd.f32 0.0, %v711
      %713 = vdwg.mxu0
      %714 = vmatpush.msra.mxu0 0.0
      %715 = vmatpush.msra.mxu0 0.0
      %716 = vmatpush.msra.mxu0 0.0
      %717 = vmatpush.msra.mxu0 0.0
      %718 = vmatpush.msra.mxu0 0.0
      %719 = vmatpush.msra.mxu0 0.0
      %720 = vmatpush.msra.mxu0 0.0
      %721 = vmatpush.msra.mxu0 0.0
      %722 = vmatpush.msra.mxu0 0.0
      %723 = vmatpush.msra.mxu0 0.0
      %724 = vmatpush.msra.mxu0 0.0
      %725 = vmatpush.msra.mxu0 0.0
      %726 = vmatpush.msra.mxu0 0.0
      %727 = vmatpush.msra.mxu0 0.0
      %728 = vmatpush.msra.mxu0 0.0
      %729 = vmatpush.msra.mxu0 %v690
      %730 = vmatmul.f32.gmra.mxu0 %v686
      %v731 = vpop.f32.mrf.mxu0
      %v732 = vadd.f32 0.0, %v731
      %733 = vdwg.mxu0
      %734 = vmatpush.msra.mxu0 0.0
      %735 = vmatpush.msra.mxu0 0.0
      %736 = vmatpush.msra.mxu0 0.0
      %737 = vmatpush.msra.mxu0 0.0
      %738 = vmatpush.msra.mxu0 0.0
      %739 = vmatpush.msra.mxu0 0.0
      %740 = vmatpush.msra.mxu0 0.0
      %741 = vmatpush.msra.mxu0 0.0
      %742 = vmatpush.msra.mxu0 0.0
      %743 = vmatpush.msra.mxu0 0.0
      %744 = vmatpush.msra.mxu0 0.0
      %745 = vmatpush.msra.mxu0 0.0
      %746 = vmatpush.msra.mxu0 0.0
      %747 = vmatpush.msra.mxu0 0.0
      %748 = vmatpush.msra.mxu0 0.0
      %749 = vmatpush.msra.mxu0 %v692
      %750 = vmatmul.f32.gmra.mxu0 %v686
      %v751 = vpop.f32.mrf.mxu0
      %v752 = vadd.f32 0.0, %v751
      %753 = vdwg.mxu0
      %v754 = vadd.f32 %v665, %v712
      %v755 = vadd.f32 %v666, %v732
      %v756 = vadd.f32 %v667, %v752
      %s757 = scalar_lea.vmem %s1, 56
      %v758 = vld [vmem:[%s757] sm:$0xff]
      %759 = vst [vmem:[#allocation1] ss:$2 sm:$0xff] %v144
      %s760 = scalar_lea.vmem [#allocation1], 16
      %761 = vst [vmem:[%s760] ss:$2 sm:$0xff] %v145
      %v762 = vld.sshfl [vmem:[#allocation1] sm:$0xff pattern:$0x75316420]
      %v763 = vld.sshfl [vmem:[#allocation1 + $0x8] sm:$0xff pattern:$0x75316420]
      %v764 = vld.sshfl [vmem:[#allocation1 + $0x10] sm:$0xff pattern:$0x75316420]
      %765 = vrot.lane.b32.xlu0 %v762, 91
      %v766 = vpop.permute.xlu0 %765
      %767 = vrot.lane.b32.xlu0 %v763, 91
      %v768 = vpop.permute.xlu0 %767
      %769 = vrot.lane.b32.xlu0 %v764, 91
      %v770 = vpop.permute.xlu0 %769
      %vm771 = vcmask 744448
      %v772 = vsel %vm771, %v766, %v768
      %v773 = vsel %vm771, %v768, %v770
      %v775 = vsel %vm166, %v758, 0
      %v777 = vsel %vm170, %v772, 0
      %v779 = vsel %vm170, %v773, 0
      %v781 = vsel %vm170, %v770, 0
      %783 = vmatpush.msra.mxu0 0.0
      %784 = vmatpush.msra.mxu0 0.0
      %785 = vmatpush.msra.mxu0 0.0
      %786 = vmatpush.msra.mxu0 0.0
      %787 = vmatpush.msra.mxu0 0.0
      %788 = vmatpush.msra.mxu0 0.0
      %789 = vmatpush.msra.mxu0 0.0
      %790 = vmatpush.msra.mxu0 0.0
      %791 = vmatpush.msra.mxu0 0.0
      %792 = vmatpush.msra.mxu0 0.0
      %793 = vmatpush.msra.mxu0 0.0
      %794 = vmatpush.msra.mxu0 0.0
      %795 = vmatpush.msra.mxu0 0.0
      %796 = vmatpush.msra.mxu0 0.0
      %797 = vmatpush.msra.mxu0 0.0
      %798 = vmatpush.msra.mxu0 %v777
      %799 = vmatmul.f32.gmra.mxu0 %v775
      %v800 = vpop.f32.mrf.mxu0
      %v801 = vadd.f32 0.0, %v800
      %802 = vdwg.mxu0
      %803 = vmatpush.msra.mxu0 0.0
      %804 = vmatpush.msra.mxu0 0.0
      %805 = vmatpush.msra.mxu0 0.0
      %806 = vmatpush.msra.mxu0 0.0
      %807 = vmatpush.msra.mxu0 0.0
      %808 = vmatpush.msra.mxu0 0.0
      %809 = vmatpush.msra.mxu0 0.0
      %810 = vmatpush.msra.mxu0 0.0
      %811 = vmatpush.msra.mxu0 0.0
      %812 = vmatpush.msra.mxu0 0.0
      %813 = vmatpush.msra.mxu0 0.0
      %814 = vmatpush.msra.mxu0 0.0
      %815 = vmatpush.msra.mxu0 0.0
      %816 = vmatpush.msra.mxu0 0.0
      %817 = vmatpush.msra.mxu0 0.0
      %818 = vmatpush.msra.mxu0 %v779
      %819 = vmatmul.f32.gmra.mxu0 %v775
      %v820 = vpop.f32.mrf.mxu0
      %v821 = vadd.f32 0.0, %v820
      %822 = vdwg.mxu0
      %823 = vmatpush.msra.mxu0 0.0
      %824 = vmatpush.msra.mxu0 0.0
      %825 = vmatpush.msra.mxu0 0.0
      %826 = vmatpush.msra.mxu0 0.0
      %827 = vmatpush.msra.mxu0 0.0
      %828 = vmatpush.msra.mxu0 0.0
      %829 = vmatpush.msra.mxu0 0.0
      %830 = vmatpush.msra.mxu0 0.0
      %831 = vmatpush.msra.mxu0 0.0
      %832 = vmatpush.msra.mxu0 0.0
      %833 = vmatpush.msra.mxu0 0.0
      %834 = vmatpush.msra.mxu0 0.0
      %835 = vmatpush.msra.mxu0 0.0
      %836 = vmatpush.msra.mxu0 0.0
      %837 = vmatpush.msra.mxu0 0.0
      %838 = vmatpush.msra.mxu0 %v781
      %839 = vmatmul.f32.gmra.mxu0 %v775
      %v840 = vpop.f32.mrf.mxu0
      %v841 = vadd.f32 0.0, %v840
      %842 = vdwg.mxu0
      %v843 = vadd.f32 %v754, %v801
      %v844 = vadd.f32 %v755, %v821
      %v845 = vadd.f32 %v756, %v841
      %s846 = scalar_lea.vmem %s1, 64
      %v847 = vld [vmem:[%s846] sm:$0xff]
      %848 = vst [vmem:[#allocation1] ss:$2 sm:$0xff] %v144
      %s849 = scalar_lea.vmem [#allocation1], 16
      %850 = vst [vmem:[%s849] ss:$2 sm:$0xff] %v145
      %v851 = vld.sshfl [vmem:[#allocation1] sm:$0xff pattern:$0x75316420]
      %v852 = vld.sshfl [vmem:[#allocation1 + $0x8] sm:$0xff pattern:$0x75316420]
      %v853 = vld.sshfl [vmem:[#allocation1 + $0x10] sm:$0xff pattern:$0x75316420]
      %854 = vrot.lane.b32.xlu0 %v851, 90
      %v855 = vpop.permute.xlu0 %854
      %856 = vrot.lane.b32.xlu0 %v852, 90
      %v857 = vpop.permute.xlu0 %856
      %858 = vrot.lane.b32.xlu0 %v853, 90
      %v859 = vpop.permute.xlu0 %858
      %vm860 = vcmask 736256
      %v861 = vsel %vm860, %v855, %v857
      %v862 = vsel %vm860, %v857, %v859
      %v864 = vsel %vm166, %v847, 0
      %v866 = vsel %vm170, %v861, 0
      %v868 = vsel %vm170, %v862, 0
      %v870 = vsel %vm170, %v859, 0
      %872 = vmatpush.msra.mxu0 0.0
      %873 = vmatpush.msra.mxu0 0.0
      %874 = vmatpush.msra.mxu0 0.0
      %875 = vmatpush.msra.mxu0 0.0
      %876 = vmatpush.msra.mxu0 0.0
      %877 = vmatpush.msra.mxu0 0.0
      %878 = vmatpush.msra.mxu0 0.0
      %879 = vmatpush.msra.mxu0 0.0
      %880 = vmatpush.msra.mxu0 0.0
      %881 = vmatpush.msra.mxu0 0.0
      %882 = vmatpush.msra.mxu0 0.0
      %883 = vmatpush.msra.mxu0 0.0
      %884 = vmatpush.msra.mxu0 0.0
      %885 = vmatpush.msra.mxu0 0.0
      %886 = vmatpush.msra.mxu0 0.0
      %887 = vmatpush.msra.mxu0 %v866
      %888 = vmatmul.f32.gmra.mxu0 %v864
      %v889 = vpop.f32.mrf.mxu0
      %v890 = vadd.f32 0.0, %v889
      %891 = vdwg.mxu0
      %892 = vmatpush.msra.mxu0 0.0
      %893 = vmatpush.msra.mxu0 0.0
      %894 = vmatpush.msra.mxu0 0.0
      %895 = vmatpush.msra.mxu0 0.0
      %896 = vmatpush.msra.mxu0 0.0
      %897 = vmatpush.msra.mxu0 0.0
      %898 = vmatpush.msra.mxu0 0.0
      %899 = vmatpush.msra.mxu0 0.0
      %900 = vmatpush.msra.mxu0 0.0
      %901 = vmatpush.msra.mxu0 0.0
      %902 = vmatpush.msra.mxu0 0.0
      %903 = vmatpush.msra.mxu0 0.0
      %904 = vmatpush.msra.mxu0 0.0
      %905 = vmatpush.msra.mxu0 0.0
      %906 = vmatpush.msra.mxu0 0.0
      %907 = vmatpush.msra.mxu0 %v868
      %908 = vmatmul.f32.gmra.mxu0 %v864
      %v909 = vpop.f32.mrf.mxu0
      %v910 = vadd.f32 0.0, %v909
      %911 = vdwg.mxu0
      %912 = vmatpush.msra.mxu0 0.0
      %913 = vmatpush.msra.mxu0 0.0
      %914 = vmatpush.msra.mxu0 0.0
      %915 = vmatpush.msra.mxu0 0.0
      %916 = vmatpush.msra.mxu0 0.0
      %917 = vmatpush.msra.mxu0 0.0
      %918 = vmatpush.msra.mxu0 0.0
      %919 = vmatpush.msra.mxu0 0.0
      %920 = vmatpush.msra.mxu0 0.0
      %921 = vmatpush.msra.mxu0 0.0
      %922 = vmatpush.msra.mxu0 0.0
      %923 = vmatpush.msra.mxu0 0.0
      %924 = vmatpush.msra.mxu0 0.0
      %925 = vmatpush.msra.mxu0 0.0
      %926 = vmatpush.msra.mxu0 0.0
      %927 = vmatpush.msra.mxu0 %v870
      %928 = vmatmul.f32.gmra.mxu0 %v864
      %v929 = vpop.f32.mrf.mxu0
      %v930 = vadd.f32 0.0, %v929
      %931 = vdwg.mxu0
      %v932 = vadd.f32 %v843, %v890
      %v933 = vadd.f32 %v844, %v910
      %v934 = vadd.f32 %v845, %v930
      %935 = vst [vmem:[%s143] sm:$0xff] %v932
      %936 = vst [vmem:[%s143 + $0x8] sm:$0xff] %v933
      %vm937 = vcmask 261120
      %938 = vst.msk [vmem:[%s143 + $0x10] sm:$0xff] %vm937, %v934
      %p939 = scmp.lt.s32.totalorder %s13, 1
      %s940 = scalar_select %p939, %s13, 1
      %s941 = smul.addr %s940, 3
      %s942 = smul.addr %s941, 8
      %s943 = scalar_lea.vmem %s2, %s942
      // Predicated region
      $region29: #{upsample_pallas.1} parent=27 // pred_check
        %p944 = pneg %p78
      $region30: #{upsample_pallas.1} parent=27 // pred_check_branch
        %946 = sbr.rel (%p944) target = $region32
      $region31: #{upsample_pallas.1} parent=27 // pred_region
        _
      $region32: #{upsample_pallas.1} parent=27 // pred_fallthru
        _
    $region28: #{upsample_pallas.1} parent=5 // pred_fallthru
      _
    %p947 = scmp.le.s32.totalorder 2, %s8
    // Predicated region
    $region33: #{upsample_pallas.1} parent=5 // pred_check
      %p948 = pneg %p947
    $region34: #{upsample_pallas.1} parent=5 // pred_check_branch
      %950 = sbr.rel (%p948) target = $region36
    $region35: #{upsample_pallas.1} parent=5 // pred_region
      %s951 = ssub.s32 %s8, 2
      // Predicated region
      $region37: #{upsample_pallas.1} parent=35 // pred_check
        %p952 = pneg %p84
      $region38: #{upsample_pallas.1} parent=35 // pred_check_branch
        %954 = sbr.rel (%p952) target = $region40
      $region39: #{upsample_pallas.1} parent=35 // pred_region
        %p955 = scmp.lt.s32.totalorder %s14, 1
        %s956 = scalar_select %p955, %s14, 1
        %s957 = smul.addr %s956, 3
        %s958 = smul.addr %s957, 8
        %s959 = scalar_lea.vmem %s2, %s958
      $region40: #{upsample_pallas.1} parent=35 // pred_fallthru
        _
    $region36: #{upsample_pallas.1} parent=5 // pred_fallthru
      _
  $region6: #{upsample_pallas.1} parent=0 // loop_footer
    %s12 = sadd.s32 1, %s8
  $region7: #{upsample_pallas.1} parent=0 // loop_footer_branch
    %7 = sbr.rel target = $region3
  $region8: #{upsample_pallas.1} parent=0 // loop_exit
    _

</llo_original>
